<compile_context>
chip_gen: v6e
topology: v6e:2x2x1
jax: 0.10.0
libtpu: 0.0.40
codegen_flags: <defaults>
</compile_context>

<pallas_src>
import functools

import jax
import jax.numpy as jnp
from jax import lax
from jax.experimental import pallas as pl
from jax.experimental.pallas import tpu as pltpu

LAYERS_WEIGHTS = [1 / n ** 2 for n in [64, 128, 256, 512, 512]]

_DN = (((1,), (1,)), ((), ()))  # contract over the last (lane) axis


# ----------------------------------------------------------------------------
# Kernels
# ----------------------------------------------------------------------------
def _gram_diff_kernel(x_ref, xh_ref, out_ref, d_acc, *, norm):
    """Grid = (B, num_hw_tiles).  Single (C, C) diff accumulator (large C).

    x_ref / xh_ref : (1, C, T) tile of the (B, C, HW_pad) flattened features.
    out_ref        : (1, 8, 128) lane-dense per-batch scalar loss slab.
    d_acc          : (C, C) f32 VMEM accumulator of (G - G_hat) * (C*HW),
                     resident across HW tiles.
    """
    t = pl.program_id(1)

    x = x_ref[0]     # (C, T)
    xh = xh_ref[0]   # (C, T)

    g = lax.dot_general(x, x, _DN, preferred_element_type=jnp.float32)
    gh = lax.dot_general(xh, xh, _DN, preferred_element_type=jnp.float32)
    d = g - gh

    @pl.when(t == 0)
    def _():
        d_acc[...] = d

    @pl.when(t != 0)
    def _():
        d_acc[...] += d

    @pl.when(t == pl.num_programs(1) - 1)
    def _():
        dd = d_acc[...] * norm
        loss = jnp.mean(dd * dd)
        out_ref[...] = jnp.full(out_ref.shape, loss, dtype=out_ref.dtype)


def _gram_diff_fused_kernel(x_ref, xh_ref, out_ref, acc, *, norm, C):
    """Fused variant for small C (2C <= 256): one (2C,T)x(2C,T)^T MXU pass.

    acc : (2C, 2C) f32 VMEM accumulator.  G lives in acc[:C,:C],
          G_hat in acc[C:,C:] (cross blocks are unused).
    """
    t = pl.program_id(1)

    s = jnp.concatenate([x_ref[0], xh_ref[0]], axis=0)  # (2C, T)
    g = lax.dot_general(s, s, _DN, preferred_element_type=jnp.float32)

    @pl.when(t == 0)
    def _():
        acc[...] = g

    @pl.when(t != 0)
    def _():
        acc[...] += g

    @pl.when(t == pl.num_programs(1) - 1)
    def _():
        a = acc[...]
        d = (a[:C, :C] - a[C:, C:]) * norm
        loss = jnp.mean(d * d)
        out_ref[...] = jnp.full(out_ref.shape, loss, dtype=out_ref.dtype)


# ----------------------------------------------------------------------------
# Per-layer wrapper
# ----------------------------------------------------------------------------
def gram_layer_loss(x, x_hat, *, reduction="mean", max_tile=8192, fuse=None):
    """Per-layer L2 distance between gram matrices (feature='gram')."""
    assert x.shape == x_hat.shape, "assert_shape(x_hat, x.shape)"
    B, C, H, W = x.shape
    HW = H * W

    dtype = jnp.promote_types(x.dtype, x_hat.dtype)
    if not jnp.issubdtype(dtype, jnp.floating):
        dtype = jnp.float32
    itemsize = jnp.dtype(dtype).itemsize

    xr = x.reshape(B, C, HW).astype(dtype)
    xh = x_hat.reshape(B, C, HW).astype(dtype)

    if fuse is None:
        fuse = (2 * C <= 256) and (C % 8 == 0)

    # --- spatial tile selection: biggest multiple of 128 within VMEM budget --
    in_budget = 20 * 1024 * 1024                  # double-buffered input tiles
    per_col = 4 * C * itemsize                    # 2 inputs x 2 buffers x C rows
    t_cap = max(128, (in_budget // per_col) // 128 * 128)
    hw128 = ((HW + 127) // 128) * 128
    T = int(max(128, (min(int(max_tile), hw128, t_cap) // 128) * 128))

    # Pad HW up to a multiple of T (zeros add nothing to F F^T).
    HW_pad = ((HW + T - 1) // T) * T
    if HW_pad != HW:
        pad = HW_pad - HW
        xr = jnp.pad(xr, ((0, 0), (0, 0), (0, pad)))
        xh = jnp.pad(xh, ((0, 0), (0, 0), (0, pad)))
    n_t = HW_pad // T
    norm = 1.0 / float(C * HW)

    if fuse:
        kernel = functools.partial(_gram_diff_fused_kernel, norm=norm, C=C)
        scratch_shapes = [pltpu.VMEM((2 * C, 2 * C), jnp.float32)]
        acc_bytes = (2 * C) * (2 * C) * 4
        mxu_flops = 2 * B * (2 * C) * (2 * C) * HW_pad
    else:
        kernel = functools.partial(_gram_diff_kernel, norm=norm)
        scratch_shapes = [pltpu.VMEM((C, C), jnp.float32)]
        acc_bytes = C * C * 4
        mxu_flops = 4 * B * C * C * HW_pad

    in_buf_bytes = 4 * C * T * itemsize           # 2 inputs x 2 buffers
    out_buf_bytes = 2 * 8 * 128 * 4
    needed = in_buf_bytes + acc_bytes + out_buf_bytes
    vmem_limit = int(min(max(needed + (8 << 20), 32 << 20), 48 << 20))

    cost = pl.CostEstimate(
        flops=int(mxu_flops),
        transcendentals=0,
        bytes_accessed=int(2 * B * C * HW_pad * itemsize + B * 8 * 128 * 4),
    )

    out = pl.pallas_call(
        kernel,
        out_shape=jax.ShapeDtypeStruct((B, 8, 128), jnp.float32),
        grid_spec=pltpu.PrefetchScalarGridSpec(
            num_scalar_prefetch=0,
            grid=(B, n_t),
            in_specs=[
                pl.BlockSpec((1, C, T), lambda b, t: (b, 0, t)),
                pl.BlockSpec((1, C, T), lambda b, t: (b, 0, t)),
            ],
            out_specs=pl.BlockSpec((1, 8, 128), lambda b, t: (b, 0, 0)),
            scratch_shapes=scratch_shapes,
        ),
        compiler_params=pltpu.CompilerParams(
            dimension_semantics=("parallel", "arbitrary"),
            vmem_limit_bytes=vmem_limit),
        cost_estimate=cost,
    )(xr, xh)

    per_batch = out[:, 0, 0]  # (B,)

    if reduction == "none":
        return per_batch
    if reduction == "sum":
        return per_batch.sum()
    return per_batch.mean()   # 'mean' (default)


def gram_loss(f_real, f_hat, weights=LAYERS_WEIGHTS, reduction="mean"):
    """GramLoss.forward: weighted sum over layers of gram L2 distances."""
    w = jnp.asarray(list(weights), dtype=jnp.float32) / len(list(weights))
    layer_losses = [
        gram_layer_loss(jax.lax.stop_gradient(fr), fh, reduction=reduction)
        for fh, fr in zip(f_hat, f_real)
    ]
    return jnp.stack(layer_losses, axis=-1) @ w


# ----------------------------------------------------------------------------
# Pure-JAX reference for correctness checking
# ----------------------------------------------------------------------------
def _ref_layer(x, x_hat):
    B, C, H, W = x.shape
    a = x.reshape(B, C, H * W).astype(jnp.float32)
    b = x_hat.reshape(B, C, H * W).astype(jnp.float32)
    hi = jax.lax.Precision.HIGHEST
    g = jnp.einsum("bct,bdt->bcd", a, a, precision=hi) / (C * H * W)
    gh = jnp.einsum("bct,bdt->bcd", b, b, precision=hi) / (C * H * W)
    return jnp.mean((g - gh) ** 2, axis=(-1, -2))  # (B,)


def _ref_gram_loss(f_real, f_hat, weights=LAYERS_WEIGHTS):
    w = jnp.asarray(list(weights), dtype=jnp.float32) / len(list(weights))
    losses = [_ref_layer(fr, fh).mean() for fr, fh in zip(f_real, f_hat)]
    return jnp.stack(losses, -1) @ w


if __name__ == "__main__":
    key = jax.random.PRNGKey(0)
    B = 2
    # 5 layers (matching the 5 default LAYERS_WEIGHTS), small shapes.
    layer_shapes = [
        (B, 8, 16, 16),    # HW=256 (128-aligned)
        (B, 8, 10, 10),    # HW=100 -> exercises zero-padding path
        (B, 16, 8, 8),     # HW=64  -> padded to 128
        (B, 16, 4, 4),
        (B, 16, 4, 4),
    ]
    f_real, f_hat = [], []
    for shp in layer_shapes:
        key, k1, k2 = jax.random.split(key, 3)
        f_real.append(jax.random.normal(k1, shp, dtype=jnp.float32))
        f_hat.append(jax.random.normal(k2, shp, dtype=jnp.float32))

    # Loose-ish tolerance: the in-kernel MXU matmul uses the backend default
    # precision for f32 operands (possibly bf16 passes), while the reference
    # einsum uses Precision.HIGHEST.
    RTOL = 5e-2

    # --- full GramLoss forward (f32, fused small-C path) ---------------------
    out = jax.block_until_ready(gram_loss(f_real, f_hat))
    ref = _ref_gram_loss(f_real, f_hat)
    assert jnp.allclose(out, ref, rtol=RTOL, atol=1e-9), (out, ref)

    # --- multi-tile accumulation path (fused kernel, n_t > 1) ----------------
    got = jax.block_until_ready(
        gram_layer_loss(f_real[0], f_hat[0], max_tile=128))
    ref_l = _ref_layer(f_real[0], f_hat[0]).mean()
    assert jnp.allclose(got, ref_l, rtol=RTOL, atol=1e-9), (got, ref_l)

    # --- large-C (non-fused) path, multi-tile ---------------------------------
    key, k1, k2 = jax.random.split(key, 3)
    xa = jax.random.normal(k1, (B, 160, 16, 16), dtype=jnp.float32)
    xb = jax.random.normal(k2, (B, 160, 16, 16), dtype=jnp.float32)
    got = jax.block_until_ready(gram_layer_loss(xa, xb, max_tile=128))
    ref_l = _ref_layer(xa, xb).mean()
    assert jnp.allclose(got, ref_l, rtol=RTOL, atol=1e-9), (got, ref_l)

    # --- bf16 inputs stay bf16 into the MXU (no wrapper upcast) ---------------
    got = jax.block_until_ready(
        gram_layer_loss(f_real[0].astype(jnp.bfloat16),
                        f_hat[0].astype(jnp.bfloat16)))
    ref_l = _ref_layer(f_real[0].astype(jnp.bfloat16),
                       f_hat[0].astype(jnp.bfloat16)).mean()
    assert jnp.allclose(got, ref_l, rtol=1e-2, atol=1e-9), (got, ref_l)

    print("KERNEL_OK")
</pallas_src>

<mosaic_0001>
module attributes {stable_mosaic.version = 11 : i64} {
  func.func @_gram_diff_fused_kernel(%arg0: i32, %arg1: i32, %arg2: memref<1x8x256xf32, #tpu.memory_space<vmem>>, %arg3: memref<1x8x256xf32, #tpu.memory_space<vmem>>, %arg4: memref<1x8x128xf32, #tpu.memory_space<vmem>>, %arg5: memref<16x16xf32, #tpu.memory_space<vmem>>) attributes {dimension_semantics = [#tpu.dimension_semantics<parallel>, #tpu.dimension_semantics<arbitrary>], iteration_bounds = array<i64: 2, 1>, scalar_prefetch = 0 : i64, scratch_operands = 1 : i64, tpu.core_type = #tpu.core_type<tc>, window_params = [{transform_indices = @transform_0, window_bounds = array<i64: 1, 8, 256>}, {transform_indices = @transform_1, window_bounds = array<i64: 1, 8, 256>}, {transform_indices = @transform_2, window_bounds = array<i64: 1, 8, 128>}]} {
    %c0 = arith.constant 0 : index
    %c0_0 = arith.constant 0 : index
    %c0_1 = arith.constant 0 : index
    %0 = vector.load %arg2[%c0, %c0_0, %c0_1] : memref<1x8x256xf32, #tpu.memory_space<vmem>>, vector<1x8x256xf32>
    %1 = vector.shape_cast %0 : vector<1x8x256xf32> to vector<8x256xf32>
    %c0_2 = arith.constant 0 : index
    %c0_3 = arith.constant 0 : index
    %c0_4 = arith.constant 0 : index
    %2 = vector.load %arg3[%c0_2, %c0_3, %c0_4] : memref<1x8x256xf32, #tpu.memory_space<vmem>>, vector<1x8x256xf32>
    %3 = vector.shape_cast %2 : vector<1x8x256xf32> to vector<8x256xf32>
    %4 = tpu.concatenate %1, %3 in 0 : vector<8x256xf32>, vector<8x256xf32> -> vector<16x256xf32>
    %cst = arith.constant dense<0.000000e+00> : vector<16x16xf32>
    %5 = tpu.matmul %4, %4, %cst {dimension_numbers = #tpu.dot_dimension_numbers<[1], [1], [0], [0], [0, 0, 1, 0], [], []>} : vector<16x256xf32>, vector<16x256xf32>, vector<16x16xf32> -> vector<16x16xf32>
    %c0_i32 = arith.constant 0 : i32
    %6 = arith.cmpi eq, %arg1, %c0_i32 : i32
    %7 = arith.extui %6 : i1 to i32
    %c0_i32_5 = arith.constant 0 : i32
    %8 = arith.cmpi ne, %7, %c0_i32_5 : i32
    scf.if %8 {
      %c0_10 = arith.constant 0 : index
      %c0_11 = arith.constant 0 : index
      %15 = vector.load %arg5[%c0_10, %c0_11] : memref<16x16xf32, #tpu.memory_space<vmem>>, vector<16x16xf32>
      tpu.vector_store %arg5[%c0_10, %c0_11], %5 {strides = array<i32>} : memref<16x16xf32, #tpu.memory_space<vmem>>, vector<16x16xf32>,
    } else {
    }
    %c0_i32_6 = arith.constant 0 : i32
    %9 = arith.cmpi ne, %arg1, %c0_i32_6 : i32
    %10 = arith.extui %9 : i1 to i32
    %c0_i32_7 = arith.constant 0 : i32
    %11 = arith.cmpi ne, %10, %c0_i32_7 : i32
    scf.if %11 {
      %c0_10 = arith.constant 0 : index
      %c0_11 = arith.constant 0 : index
      %15 = vector.load %arg5[%c0_10, %c0_11] : memref<16x16xf32, #tpu.memory_space<vmem>>, vector<16x16xf32>
      %16 = arith.addf %15, %5 : vector<16x16xf32>
      %c0_12 = arith.constant 0 : index
      %c0_13 = arith.constant 0 : index
      %17 = vector.load %arg5[%c0_12, %c0_13] : memref<16x16xf32, #tpu.memory_space<vmem>>, vector<16x16xf32>
      tpu.vector_store %arg5[%c0_12, %c0_13], %16 {strides = array<i32>} : memref<16x16xf32, #tpu.memory_space<vmem>>, vector<16x16xf32>,
    } else {
    }
    %c0_i32_8 = arith.constant 0 : i32
    %12 = arith.cmpi eq, %arg1, %c0_i32_8 : i32
    %13 = arith.extui %12 : i1 to i32
    %c0_i32_9 = arith.constant 0 : i32
    %14 = arith.cmpi ne, %13, %c0_i32_9 : i32
    scf.if %14 {
      %c0_10 = arith.constant 0 : index
      %c0_11 = arith.constant 0 : index
      %15 = vector.load %arg5[%c0_10, %c0_11] : memref<16x16xf32, #tpu.memory_space<vmem>>, vector<16x16xf32>
      %16 = vector.extract_strided_slice %15 {offsets = [0, 0], sizes = [8, 8], strides = [1, 1]} : vector<16x16xf32> to vector<8x8xf32>
      %17 = vector.extract_strided_slice %15 {offsets = [8, 8], sizes = [8, 8], strides = [1, 1]} : vector<16x16xf32> to vector<8x8xf32>
      %18 = arith.subf %16, %17 : vector<8x8xf32>
      %cst_12 = arith.constant 4.8828125E-4 : f32
      %19 = vector.broadcast %cst_12 : f32 to vector<8x8xf32>
      %20 = arith.mulf %18, %19 : vector<8x8xf32>
      %21 = arith.mulf %20, %20 : vector<8x8xf32>
      %22 = vector.shape_cast %21 : vector<8x8xf32> to vector<1x8x8xf32>
      %cst_13 = arith.constant dense<0.000000e+00> : vector<1xf32>
      %23 = vector.multi_reduction <add>, %22, %cst_13 [1, 2] : vector<1x8x8xf32> to vector<1xf32>
      %24 = vector.shape_cast %23 : vector<1xf32> to vector<1x1x1xf32>
      %25 = vector.extract %24[0, 0, 0] : f32 from vector<1x1x1xf32>
      %cst_14 = arith.constant 6.400000e+01 : f32
      %26 = arith.divf %25, %cst_14 : f32
      %27 = vector.broadcast %26 : f32 to vector<1x8x128xf32>
      %c0_15 = arith.constant 0 : index
      %c0_16 = arith.constant 0 : index
      %c0_17 = arith.constant 0 : index
      %28 = vector.load %arg4[%c0_15, %c0_16, %c0_17] : memref<1x8x128xf32, #tpu.memory_space<vmem>>, vector<1x8x128xf32>
      tpu.vector_store %arg4[%c0_15, %c0_16, %c0_17], %27 {strides = array<i32>} : memref<1x8x128xf32, #tpu.memory_space<vmem>>, vector<1x8x128xf32>,
    } else {
    }
    return
  }
  func.func @transform_0(%arg0: i32, %arg1: i32) -> (i32, i32, i32) {
    %c0_i32 = arith.constant 0 : i32
    %c0_i32_0 = arith.constant 0 : i32
    return %arg0, %c0_i32, %arg1 : i32, i32, i32
  }
  func.func @transform_1(%arg0: i32, %arg1: i32) -> (i32, i32, i32) {
    %c0_i32 = arith.constant 0 : i32
    %c0_i32_0 = arith.constant 0 : i32
    return %arg0, %c0_i32, %arg1 : i32, i32, i32
  }
  func.func @transform_2(%arg0: i32, %arg1: i32) -> (i32, i32, i32) {
    %c0_i32 = arith.constant 0 : i32
    %c0_i32_0 = arith.constant 0 : i32
    %c0_i32_1 = arith.constant 0 : i32
    return %arg0, %c0_i32, %c0_i32_0 : i32, i32, i32
  }
}

</mosaic_0001>

<llo_original>
// kernel: tpu_custom_call.1
$region0: #{tpu_custom_call.1}
  #allocation0 [shape = 'u32[]', space=smem, size = 0x4, offset = 0x4, fixed_abs, tag = 'smem constant byte address 0x4 - core index']
  #allocation1 [shape = 'u32[144,128]{1,0:T(1,128)}', space=vmem, size = 0x12000, scoped, tag = 'internal scratch']
  #allocation2 [shape = 'f32[16,16]{1,0:T(8,128)}', space=vmem, size = 0x2000, scoped, tag = 'scratch operand']
  %s0 = inlined_call_operand.hbm [shape: f32[2,8,256], index: 0, kind: input, shape index: {}]
  %s1 = inlined_call_operand.hbm [shape: f32[2,8,256], index: 1, kind: input, shape index: {}]
  %s2 = inlined_call_operand.hbm [shape: f32[2,8,128], index: 2, kind: output, shape index: {}]
  %s3 = sld [smem:[#allocation0]]
  $region61: #{tpu_custom_call.1} parent=0
    _
  %s5 = ssub.s32 1, %s3
  %s6 = scalar_select 0, %s5, %s3
  $region1: #{tpu_custom_call.1} parent=0
    #allocation3 [shape = 'u8[16384]{0}', space=vmem, size = 0x4000, scoped, tag = 'input window, operand 0']
    #allocation4 [shape = 's32[2]{0}', space=sflag, size = 0x8, scoped, tag = 'scoped memory for tpu_custom_call.1']
    #allocation5 [shape = 's32[2]{0}', space=sflag, size = 0x8, scoped, tag = 'scoped memory for tpu_custom_call.1']
    #allocation6 [shape = 'u8[16384]{0}', space=vmem, size = 0x4000, scoped, tag = 'input window, operand 1']
    #allocation7 [shape = 's32[2]{0}', space=sflag, size = 0x8, scoped, tag = 'scoped memory for tpu_custom_call.1']
    #allocation8 [shape = 'u8[8192]{0}', space=vmem, size = 0x2000, scoped, tag = 'output window, operand 0']
    %7 = vsyncpa [#allocation4], 0
    %s8 = scalar_lea.sflag [#allocation4], 1
    %9 = vsyncpa %s8, 0
    %10 = vsyncpa [#allocation7], 0
    %s11 = scalar_lea.sflag [#allocation7], 1
    %12 = vsyncpa %s11, 0
    %13 = vsyncpa [#allocation5], 0
    %s14 = scalar_lea.sflag [#allocation5], 1
    %15 = vsyncpa %s14, 0
    loop: start=0, step=1, limit=4
    $region2: #{tpu_custom_call.1} parent=1 // loop_pre_header
      _
    $region3: #{tpu_custom_call.1} parent=1 // loop_header
      %s17 = sphi 0, %s21
      %p18 = scmp.ge.s32.totalorder %s17, 4
      %s24 = sphi 0, %s36
      %s25 = sphi 0, %s32
      %s26 = sphi 0, %s24
      %s27 = sphi 0, %s25
      %s28 = sphi 0, %s26
      %s29 = sphi 0, %s27
      %s41 = sphi 0, %s43
      %s44 = sphi 0, %s41
      %s45 = sphi 0, %s44
      %s61 = sphi 0, %s45
      %s69 = sphi 0, %s71
      %s72 = sphi 0, %s69
      %s73 = sphi 0, %s72
      %s89 = sphi 0, %s73
      %s95 = sphi 0, %s97
      %s98 = sphi 0, %s95
      %s99 = sphi 0, %s98
      %s115 = sphi 0, %s99
    $region4: #{tpu_custom_call.1} parent=1 // loop_header_branch
      %20 = sbr.rel (%p18) target = $region8
    $region5: #{tpu_custom_call.1} parent=1 // loop_body
      %s22 = ssub.s32 %s17, 1
      %s23 = ssub.s32 %s17, 2
      %s30 = sadd.s32 1, %s25
      %p31 = scmp.ge.s32.totalorder %s30, 1
      %s32 = scalar_select %p31, 0, %s30
      %s33 = sadd.s32 1, %s24
      %s34 = scalar_select %p31, %s33, %s24
      %p35 = scmp.ge.s32.totalorder %s34, 2
      %s36 = scalar_select %p35, 0, %s34
      %s37 = ssub.s32 %s24, %s36
      %s38 = ssub.s32 %s25, %s32
      %s39 = sor.u32 %s37, %s38
      %p40 = scmp.eq.s32.totalorder %s39, 0
      %s42 = sadd.s32 %s41, 1
      %s43 = scalar_select %p40, %s41, %s42
      %p46 = pneg %p40
      %p47 = scmp.eq.s32.totalorder %s17, 1
      %p48 = por %p46, %p47
      %p49 = scmp.ne.s32.totalorder %s41, %s44
      %p50 = scmp.eq.s32.totalorder %s17, 0
      %p51 = por %p49, %p50
      %p52 = scmp.ne.s32.totalorder %s41, %s44
      %p53 = scmp.eq.s32.totalorder %s22, 1
      %p54 = por %p52, %p53
      %p55 = scmp.ne.s32.totalorder %s44, %s45
      %p56 = scmp.eq.s32.totalorder %s22, 0
      %p57 = por %p55, %p56
      %p58 = scmp.ne.s32.totalorder %s44, %s45
      %p59 = scmp.eq.s32.totalorder %s23, 1
      %p60 = por %p58, %p59
      %p62 = scmp.ne.s32.totalorder %s45, %s61
      %p63 = scmp.eq.s32.totalorder %s23, 0
      %p64 = por %p62, %p63
      %s65 = ssub.s32 %s24, %s36
      %s66 = ssub.s32 %s25, %s32
      %s67 = sor.u32 %s65, %s66
      %p68 = scmp.eq.s32.totalorder %s67, 0
      %s70 = sadd.s32 %s69, 1
      %s71 = scalar_select %p68, %s69, %s70
      %p74 = pneg %p68
      %p75 = scmp.eq.s32.totalorder %s17, 1
      %p76 = por %p74, %p75
      %p77 = scmp.ne.s32.totalorder %s69, %s72
      %p78 = scmp.eq.s32.totalorder %s17, 0
      %p79 = por %p77, %p78
      %p80 = scmp.ne.s32.totalorder %s69, %s72
      %p81 = scmp.eq.s32.totalorder %s22, 1
      %p82 = por %p80, %p81
      %p83 = scmp.ne.s32.totalorder %s72, %s73
      %p84 = scmp.eq.s32.totalorder %s22, 0
      %p85 = por %p83, %p84
      %p86 = scmp.ne.s32.totalorder %s72, %s73
      %p87 = scmp.eq.s32.totalorder %s23, 1
      %p88 = por %p86, %p87
      %p90 = scmp.ne.s32.totalorder %s73, %s89
      %p91 = scmp.eq.s32.totalorder %s23, 0
      %p92 = por %p90, %p91
      %s93 = ssub.s32 %s24, %s36
      %p94 = scmp.eq.s32.totalorder %s93, 0
      %s96 = sadd.s32 %s95, 1
      %s97 = scalar_select %p94, %s95, %s96
      %p100 = pneg %p94
      %p101 = scmp.eq.s32.totalorder %s17, 1
      %p102 = por %p100, %p101
      %p103 = scmp.ne.s32.totalorder %s95, %s98
      %p104 = scmp.eq.s32.totalorder %s17, 0
      %p105 = por %p103, %p104
      %p106 = scmp.ne.s32.totalorder %s95, %s98
      %p107 = scmp.eq.s32.totalorder %s22, 1
      %p108 = por %p106, %p107
      %p109 = scmp.ne.s32.totalorder %s98, %s99
      %p110 = scmp.eq.s32.totalorder %s22, 0
      %p111 = por %p109, %p110
      %p112 = scmp.ne.s32.totalorder %s98, %s99
      %p113 = scmp.eq.s32.totalorder %s23, 1
      %p114 = por %p112, %p113
      %p116 = scmp.ne.s32.totalorder %s99, %s115
      %p117 = scmp.eq.s32.totalorder %s23, 0
      %p118 = por %p116, %p117
      %p119 = scmp.le.s32.totalorder 1, %s17
      %p120 = scmp.lt.s32.totalorder %s17, 3
      %p121 = pnand %p119, %p120
      %p122 = pneg %p121
      // Predicated region
      $region9: #{tpu_custom_call.1} parent=5 // pred_check
        _
      $region10: #{tpu_custom_call.1} parent=5 // pred_check_branch
        %124 = sbr.rel (%p121) target = $region12
      $region11: #{tpu_custom_call.1} parent=5 // pred_region
        %s125 = ssub.s32 %s17, 1
      $region12: #{tpu_custom_call.1} parent=5 // pred_fallthru
        _
      %p126 = scmp.lt.s32.totalorder %s17, 2
      // Predicated region
      $region13: #{tpu_custom_call.1} parent=5 // pred_check
        %p127 = pneg %p126
      $region14: #{tpu_custom_call.1} parent=5 // pred_check_branch
        %129 = sbr.rel (%p127) target = $region16
      $region15: #{tpu_custom_call.1} parent=5 // pred_region
        // Predicated region
        $region17: #{tpu_custom_call.1} parent=15 // pred_check
          %p130 = pneg %p51
        $region18: #{tpu_custom_call.1} parent=15 // pred_check_branch
          %132 = sbr.rel (%p130) target = $region20
        $region19: #{tpu_custom_call.1} parent=15 // pred_region
          %s133 = sand.u32 %s41, 1
          %s134 = scalar_lea.sflag [#allocation4], %s133
          %s135 = sand.u32 %s41, 1
          %s136 = smul.addr %s135, 16
          %s137 = scalar_lea.vmem [#allocation3], %s136
          %s138 = smul.u32 2, %s25
          %s140 = ssub.s32 256, 256
          %141 = vsyncadd %s134, %s140
          %s142 = smul.addr %s24, 2
          %s143 = sadd.s32 %s138, %s142
          %s144 = smul.addr %s143, 128
          %s145 = scalar_lea.hbm %s0, %s144
          %s147 = sshll.u32 %s137, 4
          %s148 = int_to_ptr.vmem [resolvable:$true] %s147
          %150 = dma.hbm_to_vmem [thread:$0]  %s145, 256, %s148, %s134
        $region20: #{tpu_custom_call.1} parent=15 // pred_fallthru
          _
        // Predicated region
        $region21: #{tpu_custom_call.1} parent=15 // pred_check
          %p151 = pneg %p79
        $region22: #{tpu_custom_call.1} parent=15 // pred_check_branch
          %153 = sbr.rel (%p151) target = $region24
        $region23: #{tpu_custom_call.1} parent=15 // pred_region
          %s154 = sand.u32 %s69, 1
          %s155 = scalar_lea.sflag [#allocation7], %s154
          %s156 = sand.u32 %s69, 1
          %s157 = smul.addr %s156, 16
          %s158 = scalar_lea.vmem [#allocation6], %s157
          %s159 = smul.u32 2, %s25
          %s161 = ssub.s32 256, 256
          %162 = vsyncadd %s155, %s161
          %s163 = smul.addr %s24, 2
          %s164 = sadd.s32 %s159, %s163
          %s165 = smul.addr %s164, 128
          %s166 = scalar_lea.hbm %s1, %s165
          %s168 = sshll.u32 %s158, 4
          %s169 = int_to_ptr.vmem [resolvable:$true] %s168
          %171 = dma.hbm_to_vmem [thread:$0]  %s166, 256, %s169, %s155
        $region24: #{tpu_custom_call.1} parent=15 // pred_fallthru
          _
      $region16: #{tpu_custom_call.1} parent=5 // pred_fallthru
        _
      %p172 = scmp.le.s32.totalorder 1, %s17
      %p173 = scmp.lt.s32.totalorder %s17, 3
      %p174 = pnand %p172, %p173
      %p175 = pneg %p174
      // Predicated region
      $region25: #{tpu_custom_call.1} parent=5 // pred_check
        _
      $region26: #{tpu_custom_call.1} parent=5 // pred_check_branch
        %177 = sbr.rel (%p174) target = $region28
      $region27: #{tpu_custom_call.1} parent=5 // pred_region
        %s178 = ssub.s32 %s17, 1
        %s179 = sand.u32 %s44, 1
        %s180 = scalar_lea.sflag [#allocation4], %s179
        %s181 = sand.u32 %s44, 1
        %s182 = smul.addr %s181, 16
        %s183 = scalar_lea.vmem [#allocation3], %s182
        // Predicated region
        $region29: #{tpu_custom_call.1} parent=27 // pred_check
          %p184 = pneg %p57
        $region30: #{tpu_custom_call.1} parent=27 // pred_check_branch
          %186 = sbr.rel (%p184) target = $region32
        $region31: #{tpu_custom_call.1} parent=27 // pred_region
          %187 = dma.done %s180, 256
        $region32: #{tpu_custom_call.1} parent=27 // pred_fallthru
          _
        %s188 = sand.u32 %s72, 1
        %s189 = scalar_lea.sflag [#allocation7], %s188
        %s190 = sand.u32 %s72, 1
        %s191 = smul.addr %s190, 16
        %s192 = scalar_lea.vmem [#allocation6], %s191
        // Predicated region
        $region33: #{tpu_custom_call.1} parent=27 // pred_check
          %p193 = pneg %p85
        $region34: #{tpu_custom_call.1} parent=27 // pred_check_branch
          %195 = sbr.rel (%p193) target = $region36
        $region35: #{tpu_custom_call.1} parent=27 // pred_region
          %196 = dma.done %s189, 256
        $region36: #{tpu_custom_call.1} parent=27 // pred_fallthru
          _
        %s197 = sand.u32 %s44, 1
        %s198 = scalar_lea.sflag [#allocation4], %s197
        %s199 = sand.u32 %s44, 1
        %s200 = smul.addr %s199, 16
        %s201 = scalar_lea.vmem [#allocation3], %s200
        %p202 = pneg %p57
        %p203 = pneg %p54
        %s204 = sand.u32 %s72, 1
        %s205 = scalar_lea.sflag [#allocation7], %s204
        %s206 = sand.u32 %s72, 1
        %s207 = smul.addr %s206, 16
        %s208 = scalar_lea.vmem [#allocation6], %s207
        %p209 = pneg %p85
        %p210 = pneg %p82
        %p211 = pneg %p111
        %p212 = pneg %p108
        %s213 = sand.u32 %s98, 1
        %s214 = scalar_lea.sflag [#allocation5], %s213
        %s215 = sand.u32 %s98, 1
        %s216 = smul.addr %s215, 8
        %s217 = scalar_lea.vmem [#allocation8], %s216
        %s218 = smul.u32 2, %s27
        %s219 = smul.u32 2, %s27
        %v220 = vld [vmem:[%s183] sm:$0xff]
        %v221 = vld [vmem:[%s183 + $0x8] sm:$0xff]
        %v222 = vld [vmem:[%s192] sm:$0xff]
        %v223 = vld [vmem:[%s192 + $0x8] sm:$0xff]
        %224 = vmatprep.subr.mxu0 0.0
        %225 = vmatpush1.xpose.msra.mxu0 0.0
        %226 = vmatprep.subr.mxu0 0.0
        %227 = vmatpush1.xpose.msra.mxu0 0.0
        %228 = vmatprep.subr.mxu0 0.0
        %229 = vmatpush1.xpose.msra.mxu0 0.0
        %230 = vmatprep.subr.mxu0 0.0
        %231 = vmatpush1.xpose.msra.mxu0 0.0
        %232 = vmatprep.subr.mxu0 0.0
        %233 = vmatpush1.xpose.msra.mxu0 0.0
        %234 = vmatprep.subr.mxu0 0.0
        %235 = vmatpush1.xpose.msra.mxu0 0.0
        %236 = vmatprep.subr.mxu0 0.0
        %237 = vmatpush1.xpose.msra.mxu0 0.0
        %238 = vmatprep.subr.mxu0 0.0
        %239 = vmatpush1.xpose.msra.mxu0 0.0
        %240 = vmatprep.subr.mxu0 0.0
        %241 = vmatpush1.xpose.msra.mxu0 0.0
        %242 = vmatprep.subr.mxu0 0.0
        %243 = vmatpush1.xpose.msra.mxu0 0.0
        %244 = vmatprep.subr.mxu0 0.0
        %245 = vmatpush1.xpose.msra.mxu0 0.0
        %246 = vmatprep.subr.mxu0 0.0
        %247 = vmatpush1.xpose.msra.mxu0 0.0
        %248 = vmatprep.subr.mxu0 0.0
        %249 = vmatpush1.xpose.msra.mxu0 0.0
        %250 = vmatprep.subr.mxu0 0.0
        %251 = vmatpush1.xpose.msra.mxu0 0.0
        %252 = vmatprep.subr.mxu0 %v223
        %253 = vmatpush1.xpose.msra.mxu0 %v222
        %254 = vmatprep.subr.mxu0 %v221
        %255 = vmatpush1.xpose.msra.mxu0 %v220
        %256 = vmatprep.subr.mxu0 0.0
        %257 = vmatpush2.xpose.msra.mxu0 0.0
        %258 = vmatprep.subr.mxu0 0.0
        %259 = vmatpush2.xpose.msra.mxu0 0.0
        %260 = vmatprep.subr.mxu0 0.0
        %261 = vmatpush2.xpose.msra.mxu0 0.0
        %262 = vmatprep.subr.mxu0 0.0
        %263 = vmatpush2.xpose.msra.mxu0 0.0
        %264 = vmatprep.subr.mxu0 0.0
        %265 = vmatpush2.xpose.msra.mxu0 0.0
        %266 = vmatprep.subr.mxu0 0.0
        %267 = vmatpush2.xpose.msra.mxu0 0.0
        %268 = vmatprep.subr.mxu0 0.0
        %269 = vmatpush2.xpose.msra.mxu0 0.0
        %270 = vmatprep.subr.mxu0 0.0
        %271 = vmatpush2.xpose.msra.mxu0 0.0
        %272 = vmatprep.subr.mxu0 0.0
        %273 = vmatpush2.xpose.msra.mxu0 0.0
        %274 = vmatprep.subr.mxu0 0.0
        %275 = vmatpush2.xpose.msra.mxu0 0.0
        %276 = vmatprep.subr.mxu0 0.0
        %277 = vmatpush2.xpose.msra.mxu0 0.0
        %278 = vmatprep.subr.mxu0 0.0
        %279 = vmatpush2.xpose.msra.mxu0 0.0
        %280 = vmatprep.subr.mxu0 0.0
        %281 = vmatpush2.xpose.msra.mxu0 0.0
        %282 = vmatprep.subr.mxu0 0.0
        %283 = vmatpush2.xpose.msra.mxu0 0.0
        %284 = vmatprep.subr.mxu0 0.0
        %285 = vmatpush2.xpose.msra.mxu0 0.0
        %286 = vmatprep.subr.mxu0 0.0
        %287 = vmatpush2.xpose.msra.mxu0 0.0
        %288 = vmatprep.mubr.f32.mxu0 %v221
        %289 = vmatmul.mubr.f32.gmra.mxu0 %v220
        %v290 = vpop.f32.mrf.mxu0
        %v291 = vadd.f32 0.0, %v290
        %v292 = vpop.f32.mrf.mxu0
        %293 = vmatprep.mubr.f32.mxu0 %v223
        %294 = vmatmul.mubr.f32.gmra.mxu0 %v222
        %v295 = vpop.f32.mrf.mxu0
        %v296 = vadd.f32 0.0, %v295
        %v297 = vpop.f32.mrf.mxu0
        %298 = vdwg.mxu0
        %p299 = scmp.eq.s32.totalorder %s27, 0
        // Predicated region
        $region37: #{tpu_custom_call.1} parent=27 // pred_check
          %p300 = pneg %p299
        $region38: #{tpu_custom_call.1} parent=27 // pred_check_branch
          %302 = sbr.rel (%p300) target = $region40
        $region39: #{tpu_custom_call.1} parent=27 // pred_region
          %vm303 = vcmask 130048
          %304 = vst.msk [vmem:[#allocation2] sm:$0xff] %vm303, %v291
          %305 = vst.msk [vmem:[#allocation2 + $0x8] sm:$0xff] %vm303, %v296
        $region40: #{tpu_custom_call.1} parent=27 // pred_fallthru
          _
        %p306 = scmp.ne.s32.totalorder %s27, 0
        // Predicated region
        $region41: #{tpu_custom_call.1} parent=27 // pred_check
          %p307 = pneg %p306
        $region42: #{tpu_custom_call.1} parent=27 // pred_check_branch
          %309 = sbr.rel (%p307) target = $region44
        $region43: #{tpu_custom_call.1} parent=27 // pred_region
          %v310 = vld [vmem:[#allocation2] sm:$0xff]
          %v311 = vld [vmem:[#allocation2 + $0x8] sm:$0xff]
          %v312 = vadd.f32 %v310, %v291
          %v313 = vadd.f32 %v311, %v296
          %vm314 = vcmask 130048
          %315 = vst.msk [vmem:[#allocation2] sm:$0xff] %vm314, %v312
          %316 = vst.msk [vmem:[#allocation2 + $0x8] sm:$0xff] %vm314, %v313
        $region44: #{tpu_custom_call.1} parent=27 // pred_fallthru
          _
        // Predicated region
        $region45: #{tpu_custom_call.1} parent=27 // pred_check
          %p317 = pneg %p299
        $region46: #{tpu_custom_call.1} parent=27 // pred_check_branch
          %319 = sbr.rel (%p317) target = $region48
        $region47: #{tpu_custom_call.1} parent=27 // pred_region
          %v320 = vld [vmem:[#allocation2] sm:$0xff]
          %v321 = vld [vmem:[#allocation2 + $0x8] sm:$0xff]
          %323 = vrot.lane.b32.xlu0 %v321, 120
          %v324 = vpop.permute.xlu0 %323
          %v326 = vsub.f32 %v320, %v324
          %v327 = vmul.f32 %v326, 0.00048828125
          %v328 = vmul.f32 %v327, %v327
          %vm329 = vcmask 64512
          %v330 = vsel %vm329, %v328, 0.0
          %331 = vadd.xlane.f32.xlu0 %v330
          %v332 = vpop.xlane.xlu0 %331
          %v333 = vrot.slane %v332, 4
          %v334 = vadd.f32 %v332, %v333
          %v335 = vrot.slane %v334, 2
          %v336 = vadd.f32 %v334, %v335
          %v337 = vrot.slane %v336, 1
          %v338 = vadd.f32 %v336, %v337
          %s339 = vtos %v338
          %v340 = vrcp.pop 64.0
          %s341 = vtos %v340
          %s342 = smul.f32 %s339, %s341
          %v343 = vstv %s342
          %344 = vst [vmem:[%s217] sm:$0xff] %v343
        $region48: #{tpu_custom_call.1} parent=27 // pred_fallthru
          _
        %s345 = sand.u32 %s98, 1
        %s346 = scalar_lea.sflag [#allocation5], %s345
        %s347 = sand.u32 %s98, 1
        %s348 = smul.addr %s347, 8
        %s349 = scalar_lea.vmem [#allocation8], %s348
        // Predicated region
        $region49: #{tpu_custom_call.1} parent=27 // pred_check
          %p350 = pneg %p108
        $region50: #{tpu_custom_call.1} parent=27 // pred_check_branch
          %352 = sbr.rel (%p350) target = $region52
        $region51: #{tpu_custom_call.1} parent=27 // pred_region
          %s354 = ssub.s32 128, 128
          %355 = vsyncadd %s346, %s354
          %s356 = smul.addr %s26, 128
          %s357 = scalar_lea.hbm %s2, %s356
          %s359 = sshll.u32 %s349, 4
          %s360 = int_to_ptr.vmem [resolvable:$true] %s359
          %362 = dma.vmem_to_hbm [thread:$0]  %s360, 128, %s357, %s346
        $region52: #{tpu_custom_call.1} parent=27 // pred_fallthru
          _
      $region28: #{tpu_custom_call.1} parent=5 // pred_fallthru
        _
      %p363 = scmp.le.s32.totalorder 2, %s17
      // Predicated region
      $region53: #{tpu_custom_call.1} parent=5 // pred_check
        %p364 = pneg %p363
      $region54: #{tpu_custom_call.1} parent=5 // pred_check_branch
        %366 = sbr.rel (%p364) target = $region56
      $region55: #{tpu_custom_call.1} parent=5 // pred_region
        %s367 = ssub.s32 %s17, 2
        // Predicated region
        $region57: #{tpu_custom_call.1} parent=55 // pred_check
          %p368 = pneg %p114
        $region58: #{tpu_custom_call.1} parent=55 // pred_check_branch
          %370 = sbr.rel (%p368) target = $region60
        $region59: #{tpu_custom_call.1} parent=55 // pred_region
          %s371 = sand.u32 %s99, 1
          %s372 = scalar_lea.sflag [#allocation5], %s371
          %s373 = sand.u32 %s99, 1
          %s374 = smul.addr %s373, 8
          %s375 = scalar_lea.vmem [#allocation8], %s374
          %376 = dma.done %s372, 128
        $region60: #{tpu_custom_call.1} parent=55 // pred_fallthru
          _
      $region56: #{tpu_custom_call.1} parent=5 // pred_fallthru
        _
    $region6: #{tpu_custom_call.1} parent=1 // loop_footer
      %s21 = sadd.s32 1, %s17
    $region7: #{tpu_custom_call.1} parent=1 // loop_footer_branch
      %16 = sbr.rel target = $region3
    $region8: #{tpu_custom_call.1} parent=1 // loop_exit
      _
    %377 = vsyncpa [#allocation4], 1
    %s378 = scalar_lea.sflag [#allocation4], 1
    %379 = vsyncpa %s378, 1
    %380 = vsyncpa [#allocation7], 1
    %s381 = scalar_lea.sflag [#allocation7], 1
    %382 = vsyncpa %s381, 1
    %383 = vsyncpa [#allocation5], 1
    %s384 = scalar_lea.sflag [#allocation5], 1
    %385 = vsyncpa %s384, 1

</llo_original>
